<compile_context>
chip_gen: v5e
topology: v5e:2x2
jax: 0.10.0
libtpu: 0.0.40
codegen_flags: <defaults>
</compile_context>

<pallas_src>
import functools
from typing import NamedTuple

import jax
import jax.numpy as jnp
import numpy as np
from jax.experimental import pallas as pl
from jax.experimental.pallas import tpu as pltpu


def _round_up(x: int, m: int) -> int:
    return ((x + m - 1) // m) * m


def _round_down(x: int, m: int) -> int:
    return (x // m) * m


def _tpu_hw():
    """Returns (generation, vmem_budget_bytes, row_tile_target, two_cores, mxu_align)."""
    kind = ""
    try:
        kind = jax.devices()[0].device_kind.lower()
    except Exception:
        pass
    gen = 0
    for g in (7, 6, 5, 4, 3, 2):
        if (f"v{g}" in kind) or (f"tpu{g}" in kind):
            gen = g
            break
    if gen >= 7:
        budget, row_target, two_cores = 56 * 1024 * 1024, 768, True   # 64 MiB phys
    elif gen == 6:
        budget, row_target, two_cores = 100 * 1024 * 1024, 1024, False  # 128 MiB phys
    elif gen == 5:
        budget, row_target, two_cores = 100 * 1024 * 1024, 384, False
    elif gen == 4:
        budget, row_target, two_cores = 96 * 1024 * 1024, 512, False
    else:  # unknown: conservative
        budget, row_target, two_cores = 64 * 1024 * 1024, 512, False
    mxu_align = 256 if gen >= 6 else 128
    return gen, budget, row_target, two_cores, mxu_align


def _vmem_needed(row_tile, d_model_p, ff_tile, csz, osz, use_scratch):
    """Estimated VMEM for one grid step (double-buffered blocks + intermediates)."""
    need = 2 * row_tile * d_model_p * csz                 # x blocks
    need += 2 * row_tile * d_model_p * osz                # out blocks
    need += 2 * d_model_p * ff_tile * csz                 # w1 chunk
    need += 2 * ff_tile * d_model_p * csz                 # w2 chunk
    need += 2 * 8 * ff_tile * 4 + 2 * 8 * d_model_p * 4   # biases (sublane-padded)
    if use_scratch:
        need += row_tile * d_model_p * 4                  # f32 accumulator scratch
    need += row_tile * ff_tile * 4                        # h intermediate (f32)
    need += row_tile * ff_tile * csz                      # h cast for 2nd matmul
    return need


class FFNConfig(NamedTuple):
    d_model: int
    d_ff: int
    d_model_p: int
    d_ff_p: int
    ff_tile: int
    row_tile_target: int
    vmem_limit: int
    two_cores: bool
    compute_dtype: np.dtype


def prepare_feed_forward(w1, b1, w2, b2, *, compute_dtype=jnp.bfloat16,
                         ff_tile=None):
    """Pre-cast / pre-pad the FFN parameters once.

    w1: (d_model, d_ff), b1: (d_ff,), w2: (d_ff, d_model), b2: (d_model,).
    Returns (params, cfg) for `feed_forward_block`.
    """
    d_model, d_ff = int(w1.shape[0]), int(w1.shape[1])
    compute_dtype = jnp.dtype(compute_dtype)
    csz = compute_dtype.itemsize
    gen, budget, row_target, two_cores, mxu_align = _tpu_hw()

    d_model_p = _round_up(d_model, mxu_align)
    d_ff_full = _round_up(d_ff, mxu_align)

    if ff_tile is None:
        # Keep the full (padded) weights VMEM-resident when the working set fits;
        # otherwise stream d_ff in chunks.
        resident_need = _vmem_needed(min(row_target, 256), d_model_p, d_ff_full,
                                     csz, 4, use_scratch=False)
        if int(resident_need * 1.15) <= budget:
            ff_tile = d_ff_full
        else:
            ff_tile = 512 if gen < 7 else 256
    ff_tile = _round_up(min(int(ff_tile), d_ff_full), 128)
    d_ff_p = _round_up(d_ff, ff_tile)

    w1_p = jnp.pad(jnp.asarray(w1, compute_dtype),
                   ((0, d_model_p - d_model), (0, d_ff_p - d_ff)))
    w2_p = jnp.pad(jnp.asarray(w2, compute_dtype),
                   ((0, d_ff_p - d_ff), (0, d_model_p - d_model)))
    b1_p = jnp.pad(jnp.asarray(b1, jnp.float32),
                   (0, d_ff_p - d_ff)).reshape(1, d_ff_p)
    b2_p = jnp.pad(jnp.asarray(b2, jnp.float32),
                   (0, d_model_p - d_model)).reshape(1, d_model_p)

    cfg = FFNConfig(d_model=d_model, d_ff=d_ff, d_model_p=int(d_model_p),
                    d_ff_p=int(d_ff_p), ff_tile=int(ff_tile),
                    row_tile_target=int(row_target), vmem_limit=int(budget),
                    two_cores=bool(two_cores), compute_dtype=compute_dtype)
    return (w1_p, b1_p, w2_p, b2_p), cfg


# ----------------------------- kernels -------------------------------------


def _ffn_kernel_fused(x_ref, w1_ref, b1_ref, w2_ref, b2_ref, o_ref):
    # Single d_ff chunk: weights resident, both matmuls fused, no scratch.
    h = jnp.dot(x_ref[...], w1_ref[...], preferred_element_type=jnp.float32)
    h = jnp.maximum(h + b1_ref[...], 0.0)          # bias + ReLU; dropout = identity
    out = jnp.dot(h.astype(w2_ref.dtype), w2_ref[...],
                  preferred_element_type=jnp.float32)
    o_ref[...] = (out + b2_ref[...]).astype(o_ref.dtype)


def _ffn_kernel_acc_out(x_ref, w1_ref, b1_ref, w2_ref, b2_ref, o_ref):
    # d_ff chunked; f32 output block doubles as the accumulator (saves VMEM).
    k = pl.program_id(1)

    @pl.when(k == 0)
    def _():
        o_ref[...] = jnp.broadcast_to(b2_ref[...], o_ref.shape)

    h = jnp.dot(x_ref[...], w1_ref[...], preferred_element_type=jnp.float32)
    h = jnp.maximum(h + b1_ref[...], 0.0)
    o_ref[...] += jnp.dot(h.astype(w2_ref.dtype), w2_ref[...],
                          preferred_element_type=jnp.float32)


def _ffn_kernel_acc_scratch(x_ref, w1_ref, b1_ref, w2_ref, b2_ref, o_ref,
                            acc_ref):
    # d_ff chunked; f32 VMEM scratch accumulator (non-f32 output dtype).
    k = pl.program_id(1)

    @pl.when(k == 0)
    def _():
        acc_ref[...] = jnp.broadcast_to(b2_ref[...], acc_ref.shape)

    h = jnp.dot(x_ref[...], w1_ref[...], preferred_element_type=jnp.float32)
    h = jnp.maximum(h + b1_ref[...], 0.0)
    acc_ref[...] += jnp.dot(h.astype(w2_ref.dtype), w2_ref[...],
                            preferred_element_type=jnp.float32)

    @pl.when(k == pl.num_programs(1) - 1)
    def _():
        o_ref[...] = acc_ref[...].astype(o_ref.dtype)


# ----------------------------- wrapper --------------------------------------


@functools.partial(jax.jit, static_argnames=("cfg",))
def feed_forward_block(x, params, cfg: FFNConfig):
    """x: (batch, seq, d_model). params/cfg from prepare_feed_forward."""
    w1_p, b1_p, w2_p, b2_p = params
    batch, seq, d_model = x.shape
    assert d_model == cfg.d_model
    out_dtype = x.dtype
    rows = batch * seq
    d_model_p, d_ff_p, ff_tile = cfg.d_model_p, cfg.d_ff_p, cfg.ff_tile
    compute_dtype = cfg.compute_dtype
    csz = compute_dtype.itemsize
    osz = jnp.dtype(out_dtype).itemsize
    n_ff = d_ff_p // ff_tile
    use_scratch = (n_ff > 1) and (jnp.dtype(out_dtype) != jnp.dtype(jnp.float32))

    # ---- Row tile selection: generation target, 2-core split, VMEM fit. ----
    sub = 16                                   # bf16 sublane packing multiple
    rows_aligned = _round_up(rows, sub)
    row_tile = max(_round_down(min(cfg.row_tile_target, rows_aligned), sub), sub)
    if cfg.two_cores and rows >= 256 and rows_aligned <= row_tile:
        # Split a single oversized row tile so both TensorCores get work.
        row_tile = max(_round_up(-(-rows // 2), sub), sub)
    while row_tile > sub and int(
            _vmem_needed(row_tile, d_model_p, ff_tile, csz, osz, use_scratch)
            * 1.15) > cfg.vmem_limit:
        step = 128 if row_tile > 128 else sub
        row_tile = max(_round_down(row_tile - step, sub), sub)
    rows_p = _round_up(rows, row_tile)
    n_rows = rows_p // row_tile

    x2d = x.reshape(rows, d_model).astype(compute_dtype)
    x2d = jnp.pad(x2d, ((0, rows_p - rows), (0, d_model_p - d_model)))

    # Advisory cost: weights re-stream once per row tile only when d_ff is chunked.
    weight_passes = 1 if n_ff == 1 else n_rows
    bytes_accessed = (rows_p * d_model_p * (csz + osz)
                      + (w1_p.size + w2_p.size) * csz * weight_passes
                      + (b1_p.size + b2_p.size) * 4)
    flops = 4 * rows_p * d_model_p * d_ff_p
    cost = pl.CostEstimate(flops=int(flops), transcendentals=0,
                           bytes_accessed=int(bytes_accessed))

    if n_ff == 1:
        grid = (n_rows,)
        in_specs = [
            pl.BlockSpec((row_tile, d_model_p), lambda i: (i, 0)),
            pl.BlockSpec((d_model_p, ff_tile), lambda i: (0, 0)),
            pl.BlockSpec((1, ff_tile), lambda i: (0, 0)),
            pl.BlockSpec((ff_tile, d_model_p), lambda i: (0, 0)),
            pl.BlockSpec((1, d_model_p), lambda i: (0, 0)),
        ]
        out_specs = pl.BlockSpec((row_tile, d_model_p), lambda i: (i, 0))
        kernel = _ffn_kernel_fused
        scratch_shapes = []
        dim_sem = ("parallel",)
    else:
        grid = (n_rows, n_ff)
        in_specs = [
            pl.BlockSpec((row_tile, d_model_p), lambda i, k: (i, 0)),
            pl.BlockSpec((d_model_p, ff_tile), lambda i, k: (0, k)),
            pl.BlockSpec((1, ff_tile), lambda i, k: (0, k)),
            pl.BlockSpec((ff_tile, d_model_p), lambda i, k: (k, 0)),
            pl.BlockSpec((1, d_model_p), lambda i, k: (0, 0)),
        ]
        out_specs = pl.BlockSpec((row_tile, d_model_p), lambda i, k: (i, 0))
        dim_sem = ("parallel", "arbitrary")
        if use_scratch:
            kernel = _ffn_kernel_acc_scratch
            scratch_shapes = [pltpu.VMEM((row_tile, d_model_p), jnp.float32)]
        else:
            kernel = _ffn_kernel_acc_out
            scratch_shapes = []

    out2d = pl.pallas_call(
        kernel,
        out_shape=jax.ShapeDtypeStruct((rows_p, d_model_p), out_dtype),
        grid_spec=pltpu.PrefetchScalarGridSpec(
            num_scalar_prefetch=0,
            grid=grid,
            in_specs=in_specs,
            out_specs=out_specs,
            scratch_shapes=scratch_shapes,
        ),
        compiler_params=pltpu.CompilerParams(
            dimension_semantics=dim_sem,
            vmem_limit_bytes=cfg.vmem_limit,
        ),
        cost_estimate=cost,
    )(x2d, w1_p, b1_p, w2_p, b2_p)

    return out2d[:rows, :d_model].reshape(batch, seq, d_model)


# ----------------------------- test harness ---------------------------------


def _init_params(key, d_model, d_ff, dtype=jnp.float32):
    # Mimics nn.Linear's uniform(-1/sqrt(fan_in), 1/sqrt(fan_in)) init.
    k1, k2, k3, k4 = jax.random.split(key, 4)
    lim1 = 1.0 / float(np.sqrt(d_model))
    lim2 = 1.0 / float(np.sqrt(d_ff))
    # Stored transposed vs PyTorch: w1 is (d_model, d_ff), w2 is (d_ff, d_model).
    w1 = jax.random.uniform(k1, (d_model, d_ff), dtype, -lim1, lim1)
    b1 = jax.random.uniform(k2, (d_ff,), dtype, -lim1, lim1)
    w2 = jax.random.uniform(k3, (d_ff, d_model), dtype, -lim2, lim2)
    b2 = jax.random.uniform(k4, (d_model,), dtype, -lim2, lim2)
    return w1, b1, w2, b2


if __name__ == "__main__":
    key = jax.random.PRNGKey(0)
    kx, kp, kx2 = jax.random.split(key, 3)

    # --- Small config: resident-weight / fused path. ---
    batch, seq, d_model, d_ff = 2, 8, 32, 64
    x = jax.random.normal(kx, (batch, seq, d_model), jnp.float32)
    w1, b1, w2, b2 = _init_params(kp, d_model, d_ff)
    ref = jnp.maximum(x @ w1 + b1, 0.0) @ w2 + b2   # eval-mode dropout == identity

    params_f32, cfg_f32 = prepare_feed_forward(w1, b1, w2, b2,
                                               compute_dtype=jnp.float32)
    out_f32 = jax.block_until_ready(feed_forward_block(x, params_f32, cfg=cfg_f32))
    assert out_f32.shape == (batch, seq, d_model)
    assert jnp.allclose(out_f32, ref, atol=1e-5, rtol=1e-5)

    params_bf16, cfg_bf16 = prepare_feed_forward(w1, b1, w2, b2)
    out_bf16 = jax.block_until_ready(feed_forward_block(x, params_bf16, cfg=cfg_bf16))
    assert out_bf16.shape == (batch, seq, d_model)
    assert jnp.allclose(out_bf16, ref, atol=5e-2, rtol=5e-2)

    # --- Chunked-d_ff path (forces the reduction grid axis > 1). ---
    batch2, seq2, d_model2, d_ff2 = 2, 64, 128, 512
    x2 = jax.random.normal(kx2, (batch2, seq2, d_model2), jnp.float32)
    w1b, b1b, w2b, b2b = _init_params(kp, d_model2, d_ff2)
    ref2 = jnp.maximum(x2 @ w1b + b1b, 0.0) @ w2b + b2b

    params_c, cfg_c = prepare_feed_forward(w1b, b1b, w2b, b2b, ff_tile=128)
    assert cfg_c.d_ff_p // cfg_c.ff_tile > 1
    # f32 output -> partials accumulate directly into the output block.
    out_c = jax.block_until_ready(feed_forward_block(x2, params_c, cfg=cfg_c))
    assert out_c.shape == (batch2, seq2, d_model2)
    assert jnp.allclose(out_c, ref2, atol=5e-2, rtol=5e-2)
    # bf16 output -> f32 VMEM-scratch accumulator variant.
    out_d = jax.block_until_ready(
        feed_forward_block(x2.astype(jnp.bfloat16), params_c, cfg=cfg_c))
    assert jnp.allclose(out_d.astype(jnp.float32), ref2, atol=1e-1, rtol=1e-1)

    print("KERNEL_OK")
</pallas_src>

<mosaic_0001>
module attributes {stable_mosaic.version = 11 : i64} {
  func.func @_ffn_kernel_fused(%arg0: i32, %arg1: memref<16x128xf32, #tpu.memory_space<vmem>>, %arg2: memref<128x128xf32, #tpu.memory_space<vmem>>, %arg3: memref<1x128xf32, #tpu.memory_space<vmem>>, %arg4: memref<128x128xf32, #tpu.memory_space<vmem>>, %arg5: memref<1x128xf32, #tpu.memory_space<vmem>>, %arg6: memref<16x128xf32, #tpu.memory_space<vmem>>) attributes {dimension_semantics = [#tpu.dimension_semantics<parallel>], iteration_bounds = array<i64: 1>, scalar_prefetch = 0 : i64, scratch_operands = 0 : i64, tpu.core_type = #tpu.core_type<tc>, window_params = [{transform_indices = @transform_0, window_bounds = array<i64: 16, 128>}, {pipeline_mode = #tpu.pipeline_mode<synchronous>, transform_indices = @transform_1, window_bounds = array<i64: 128, 128>}, {pipeline_mode = #tpu.pipeline_mode<synchronous>, transform_indices = @transform_2, window_bounds = array<i64: 1, 128>}, {pipeline_mode = #tpu.pipeline_mode<synchronous>, transform_indices = @transform_3, window_bounds = array<i64: 128, 128>}, {pipeline_mode = #tpu.pipeline_mode<synchronous>, transform_indices = @transform_4, window_bounds = array<i64: 1, 128>}, {transform_indices = @transform_5, window_bounds = array<i64: 16, 128>}]} {
    %c0 = arith.constant 0 : index
    %c0_0 = arith.constant 0 : index
    %0 = vector.load %arg1[%c0, %c0_0] : memref<16x128xf32, #tpu.memory_space<vmem>>, vector<16x128xf32>
    %c0_1 = arith.constant 0 : index
    %c0_2 = arith.constant 0 : index
    %1 = vector.load %arg2[%c0_1, %c0_2] : memref<128x128xf32, #tpu.memory_space<vmem>>, vector<128x128xf32>
    %cst = arith.constant dense<0.000000e+00> : vector<16x128xf32>
    %2 = tpu.matmul %0, %1, %cst {dimension_numbers = #tpu.dot_dimension_numbers<[1], [0], [0], [1], [0, 0, 1, 1], [], []>} : vector<16x128xf32>, vector<128x128xf32>, vector<16x128xf32> -> vector<16x128xf32>
    %c0_3 = arith.constant 0 : index
    %c0_4 = arith.constant 0 : index
    %3 = vector.load %arg3[%c0_3, %c0_4] : memref<1x128xf32, #tpu.memory_space<vmem>>, vector<1x128xf32>
    %4 = vector.broadcast %3 : vector<1x128xf32> to vector<16x128xf32>
    %5 = arith.addf %2, %4 : vector<16x128xf32>
    %cst_5 = arith.constant 0.000000e+00 : f32
    %6 = vector.broadcast %cst_5 : f32 to vector<16x128xf32>
    %7 = arith.maximumf %5, %6 : vector<16x128xf32>
    %c0_6 = arith.constant 0 : index
    %c0_7 = arith.constant 0 : index
    %8 = vector.load %arg4[%c0_6, %c0_7] : memref<128x128xf32, #tpu.memory_space<vmem>>, vector<128x128xf32>
    %cst_8 = arith.constant dense<0.000000e+00> : vector<16x128xf32>
    %9 = tpu.matmul %7, %8, %cst_8 {dimension_numbers = #tpu.dot_dimension_numbers<[1], [0], [0], [1], [0, 0, 1, 1], [], []>} : vector<16x128xf32>, vector<128x128xf32>, vector<16x128xf32> -> vector<16x128xf32>
    %c0_9 = arith.constant 0 : index
    %c0_10 = arith.constant 0 : index
    %10 = vector.load %arg5[%c0_9, %c0_10] : memref<1x128xf32, #tpu.memory_space<vmem>>, vector<1x128xf32>
    %11 = vector.broadcast %10 : vector<1x128xf32> to vector<16x128xf32>
    %12 = arith.addf %9, %11 : vector<16x128xf32>
    %c0_11 = arith.constant 0 : index
    %c0_12 = arith.constant 0 : index
    %13 = vector.load %arg6[%c0_11, %c0_12] : memref<16x128xf32, #tpu.memory_space<vmem>>, vector<16x128xf32>
    tpu.vector_store %arg6[%c0_11, %c0_12], %12 {strides = array<i32>} : memref<16x128xf32, #tpu.memory_space<vmem>>, vector<16x128xf32>,
    return
  }
  func.func @transform_0(%arg0: i32) -> (i32, i32) {
    %c0_i32 = arith.constant 0 : i32
    %c0_i32_0 = arith.constant 0 : i32
    return %arg0, %c0_i32 : i32, i32
  }
  func.func @transform_1(%arg0: i32) -> (i32, i32) {
    %c0_i32 = arith.constant 0 : i32
    %c0_i32_0 = arith.constant 0 : i32
    %c0_i32_1 = arith.constant 0 : i32
    return %c0_i32, %c0_i32_0 : i32, i32
  }
  func.func @transform_2(%arg0: i32) -> (i32, i32) {
    %c0_i32 = arith.constant 0 : i32
    %c0_i32_0 = arith.constant 0 : i32
    %c0_i32_1 = arith.constant 0 : i32
    return %c0_i32, %c0_i32_0 : i32, i32
  }
  func.func @transform_3(%arg0: i32) -> (i32, i32) {
    %c0_i32 = arith.constant 0 : i32
    %c0_i32_0 = arith.constant 0 : i32
    %c0_i32_1 = arith.constant 0 : i32
    return %c0_i32, %c0_i32_0 : i32, i32
  }
  func.func @transform_4(%arg0: i32) -> (i32, i32) {
    %c0_i32 = arith.constant 0 : i32
    %c0_i32_0 = arith.constant 0 : i32
    %c0_i32_1 = arith.constant 0 : i32
    return %c0_i32, %c0_i32_0 : i32, i32
  }
  func.func @transform_5(%arg0: i32) -> (i32, i32) {
    %c0_i32 = arith.constant 0 : i32
    %c0_i32_0 = arith.constant 0 : i32
    return %arg0, %c0_i32 : i32, i32
  }
}

</mosaic_0001>

<llo_original>
// kernel: feed_forward_block.1
$region0: #{feed_forward_block.1}
  #allocation0 [shape = 'u32[]', space=smem, size = 0x4, offset = 0x4, fixed_abs, tag = 'smem constant byte address 0x4 - core index']
  #allocation1 [shape = 'u32[72,128]{1,0:T(1,128)}', space=vmem, size = 0x9000, scoped, tag = 'internal scratch']
  %s0 = inlined_call_operand.vmem [shape: f32[16,128], index: 0, kind: input, shape index: {}]
  %s1 = inlined_call_operand.hbm [shape: f32[128,128], index: 1, kind: input, shape index: {}]
  %s2 = inlined_call_operand.vmem [shape: f32[1,128], index: 2, kind: input, shape index: {}]
  %s3 = inlined_call_operand.hbm [shape: f32[128,128], index: 3, kind: input, shape index: {}]
  %s4 = inlined_call_operand.vmem [shape: f32[1,128], index: 4, kind: input, shape index: {}]
  %s5 = inlined_call_operand.vmem [shape: f32[16,128], index: 5, kind: output, shape index: {}]
  %s6 = sld [smem:[#allocation0]]
  $region38: #{feed_forward_block.1} parent=0
    _
  %s8 = ssub.s32 1, %s6
  %s9 = scalar_select 0, %s8, %s6
  $region1: #{feed_forward_block.1} parent=0
    #allocation2 [shape = 'u8[65536]{0}', space=vmem, size = 0x10000, scoped, tag = 'input window, operand 1, single buffered']
    #allocation3 [shape = 's32[1]{0}', space=sflag, size = 0x4, scoped, tag = 'scoped memory for feed_forward_block.1']
    #allocation4 [shape = 'u8[65536]{0}', space=vmem, size = 0x10000, scoped, tag = 'input window, operand 3, single buffered']
    #allocation5 [shape = 's32[1]{0}', space=sflag, size = 0x4, scoped, tag = 'scoped memory for feed_forward_block.1']
    %10 = vsyncpa [#allocation3], 0
    %11 = vsyncpa [#allocation5], 0
    // Predicated region
    $region2: #{feed_forward_block.1} parent=1 // pred_check
      _
    $region3: #{feed_forward_block.1} parent=1 // pred_check_branch
      %13 = sbr.rel (0) target = $region5
    $region4: #{feed_forward_block.1} parent=1 // pred_region
      _
    $region5: #{feed_forward_block.1} parent=1 // pred_fallthru
      _
    // Predicated region
    $region6: #{feed_forward_block.1} parent=1 // pred_check
      _
    $region7: #{feed_forward_block.1} parent=1 // pred_check_branch
      %15 = sbr.rel (0) target = $region9
    $region8: #{feed_forward_block.1} parent=1 // pred_region
      %17 = vsyncadd [#allocation3], 0
      %s18 = sshll.u32 %s1, 4
      %s19 = int_to_ptr.hbm [resolvable:$true] %s18
      %s20 = sshll.u32 [#allocation2], 4
      %s21 = int_to_ptr.vmem [resolvable:$true] %s20
      %26 = dma.hbm_to_vmem [thread:$0]  %s19, 2048, %s21, [#allocation3], 128, 128, 8
    $region9: #{feed_forward_block.1} parent=1 // pred_fallthru
      _
    // Predicated region
    $region10: #{feed_forward_block.1} parent=1 // pred_check
      _
    $region11: #{feed_forward_block.1} parent=1 // pred_check_branch
      %28 = sbr.rel (0) target = $region13
    $region12: #{feed_forward_block.1} parent=1 // pred_region
      _
    $region13: #{feed_forward_block.1} parent=1 // pred_fallthru
      _
    // Predicated region
    $region14: #{feed_forward_block.1} parent=1 // pred_check
      _
    $region15: #{feed_forward_block.1} parent=1 // pred_check_branch
      %30 = sbr.rel (0) target = $region17
    $region16: #{feed_forward_block.1} parent=1 // pred_region
      %32 = vsyncadd [#allocation5], 0
      %s33 = sshll.u32 %s3, 4
      %s34 = int_to_ptr.hbm [resolvable:$true] %s33
      %s35 = sshll.u32 [#allocation4], 4
      %s36 = int_to_ptr.vmem [resolvable:$true] %s35
      %41 = dma.hbm_to_vmem [thread:$0]  %s34, 2048, %s36, [#allocation5], 128, 128, 8
    $region17: #{feed_forward_block.1} parent=1 // pred_fallthru
      _
    // Predicated region
    $region18: #{feed_forward_block.1} parent=1 // pred_check
      _
    $region19: #{feed_forward_block.1} parent=1 // pred_check_branch
      %43 = sbr.rel (0) target = $region21
    $region20: #{feed_forward_block.1} parent=1 // pred_region
      _
    $region21: #{feed_forward_block.1} parent=1 // pred_fallthru
      _
    // Predicated region
    $region22: #{feed_forward_block.1} parent=1 // pred_check
      _
    $region23: #{feed_forward_block.1} parent=1 // pred_check_branch
      %45 = sbr.rel (0) target = $region25
    $region24: #{feed_forward_block.1} parent=1 // pred_region
      %47 = dma.done [#allocation3], 2048
    $region25: #{feed_forward_block.1} parent=1 // pred_fallthru
      _
    // Predicated region
    $region26: #{feed_forward_block.1} parent=1 // pred_check
      _
    $region27: #{feed_forward_block.1} parent=1 // pred_check_branch
      %49 = sbr.rel (0) target = $region29
    $region28: #{feed_forward_block.1} parent=1 // pred_region
      %51 = dma.done [#allocation5], 2048
    $region29: #{feed_forward_block.1} parent=1 // pred_fallthru
      _
    %v52 = vld [vmem:[%s0] sm:$0xff]
    %v53 = vld [vmem:[%s0 + $0x8] sm:$0xff]
    %v54 = vld [vmem:[#allocation2] sm:$0xff]
    %v55 = vld [vmem:[#allocation2 + $0x8] sm:$0xff]
    %v56 = vld [vmem:[#allocation2 + $0x10] sm:$0xff]
    %v57 = vld [vmem:[#allocation2 + $0x18] sm:$0xff]
    %v58 = vld [vmem:[#allocation2 + $0x20] sm:$0xff]
    %v59 = vld [vmem:[#allocation2 + $0x28] sm:$0xff]
    %v60 = vld [vmem:[#allocation2 + $0x30] sm:$0xff]
    %v61 = vld [vmem:[#allocation2 + $0x38] sm:$0xff]
    %v62 = vld [vmem:[#allocation2 + $0x40] sm:$0xff]
    %v63 = vld [vmem:[#allocation2 + $0x48] sm:$0xff]
    %v64 = vld [vmem:[#allocation2 + $0x50] sm:$0xff]
    %v65 = vld [vmem:[#allocation2 + $0x58] sm:$0xff]
    %v66 = vld [vmem:[#allocation2 + $0x60] sm:$0xff]
    %v67 = vld [vmem:[#allocation2 + $0x68] sm:$0xff]
    %v68 = vld [vmem:[#allocation2 + $0x70] sm:$0xff]
    %v69 = vld [vmem:[#allocation2 + $0x78] sm:$0xff]
    %v70 = vld [vmem:[%s2] sm:$0x1]
    %v72 = vperm.slane %v70, 0
    %74 = vmatpush.msra.mxu0 %v69
    %75 = vmatpush.msra.mxu0 %v68
    %76 = vmatpush.msra.mxu0 %v67
    %77 = vmatpush.msra.mxu0 %v66
    %78 = vmatpush.msra.mxu0 %v65
    %79 = vmatpush.msra.mxu0 %v64
    %80 = vmatpush.msra.mxu0 %v63
    %81 = vmatpush.msra.mxu0 %v62
    %82 = vmatpush.msra.mxu0 %v61
    %83 = vmatpush.msra.mxu0 %v60
    %84 = vmatpush.msra.mxu0 %v59
    %85 = vmatpush.msra.mxu0 %v58
    %86 = vmatpush.msra.mxu0 %v57
    %87 = vmatpush.msra.mxu0 %v56
    %88 = vmatpush.msra.mxu0 %v55
    %89 = vmatpush.msra.mxu0 %v54
    %90 = vmatmul.f32.gmra.mxu0 %v52
    %v91 = vpop.f32.mrf.mxu0
    %v92 = vadd.f32 %v72, %v91
    %93 = vmatmul.f32.gmra.mxu0 %v53
    %v94 = vpop.f32.mrf.mxu0
    %v95 = vadd.f32 %v72, %v94
    %96 = vdwg.mxu0
    %v97 = vmax.f32 %v92, 0.0
    %v98 = vmax.f32 %v95, 0.0
    %v99 = vld [vmem:[#allocation4] sm:$0xff]
    %v100 = vld [vmem:[#allocation4 + $0x8] sm:$0xff]
    %v101 = vld [vmem:[#allocation4 + $0x10] sm:$0xff]
    %v102 = vld [vmem:[#allocation4 + $0x18] sm:$0xff]
    %v103 = vld [vmem:[#allocation4 + $0x20] sm:$0xff]
    %v104 = vld [vmem:[#allocation4 + $0x28] sm:$0xff]
    %v105 = vld [vmem:[#allocation4 + $0x30] sm:$0xff]
    %v106 = vld [vmem:[#allocation4 + $0x38] sm:$0xff]
    %v107 = vld [vmem:[#allocation4 + $0x40] sm:$0xff]
    %v108 = vld [vmem:[#allocation4 + $0x48] sm:$0xff]
    %v109 = vld [vmem:[#allocation4 + $0x50] sm:$0xff]
    %v110 = vld [vmem:[#allocation4 + $0x58] sm:$0xff]
    %v111 = vld [vmem:[#allocation4 + $0x60] sm:$0xff]
    %v112 = vld [vmem:[#allocation4 + $0x68] sm:$0xff]
    %v113 = vld [vmem:[#allocation4 + $0x70] sm:$0xff]
    %v114 = vld [vmem:[#allocation4 + $0x78] sm:$0xff]
    %v115 = vld [vmem:[%s4] sm:$0x1]
    %v117 = vperm.slane %v115, 0
    %119 = vmatpush.msra.mxu0 %v114
    %120 = vmatpush.msra.mxu0 %v113
    %121 = vmatpush.msra.mxu0 %v112
    %122 = vmatpush.msra.mxu0 %v111
    %123 = vmatpush.msra.mxu0 %v110
    %124 = vmatpush.msra.mxu0 %v109
    %125 = vmatpush.msra.mxu0 %v108
    %126 = vmatpush.msra.mxu0 %v107
    %127 = vmatpush.msra.mxu0 %v106
    %128 = vmatpush.msra.mxu0 %v105
    %129 = vmatpush.msra.mxu0 %v104
    %130 = vmatpush.msra.mxu0 %v103
    %131 = vmatpush.msra.mxu0 %v102
    %132 = vmatpush.msra.mxu0 %v101
    %133 = vmatpush.msra.mxu0 %v100
    %134 = vmatpush.msra.mxu0 %v99
    %135 = vmatmul.f32.gmra.mxu0 %v97
    %v136 = vpop.f32.mrf.mxu0
    %v137 = vadd.f32 %v117, %v136
    %138 = vmatmul.f32.gmra.mxu0 %v98
    %v139 = vpop.f32.mrf.mxu0
    %v140 = vadd.f32 %v117, %v139
    %141 = vdwg.mxu0
    %142 = vst [vmem:[%s5] sm:$0xff] %v137
    %143 = vst [vmem:[%s5 + $0x8] sm:$0xff] %v140
    // Predicated region
    $region30: #{feed_forward_block.1} parent=1 // pred_check
      _
    $region31: #{feed_forward_block.1} parent=1 // pred_check_branch
      %145 = sbr.rel (0) target = $region33
    $region32: #{feed_forward_block.1} parent=1 // pred_region
      _
    $region33: #{feed_forward_block.1} parent=1 // pred_fallthru
      _
    // Predicated region
    $region34: #{feed_forward_block.1} parent=1 // pred_check
      _
    $region35: #{feed_forward_block.1} parent=1 // pred_check_branch
      %147 = sbr.rel (0) target = $region37
    $region36: #{feed_forward_block.1} parent=1 // pred_region
      _
    $region37: #{feed_forward_block.1} parent=1 // pred_fallthru
      _
    %148 = vsyncpa [#allocation3], 1
    %149 = vsyncpa [#allocation5], 1

</llo_original>
